<compile_context>
chip_gen: v7x
topology: tpu7x:2x2x1
jax: 0.10.0
libtpu: 0.0.40
codegen_flags: <defaults>
</compile_context>

<pallas_src>
import jax
import jax.numpy as jnp
from jax.experimental import pallas as pl
from jax.experimental.pallas import tpu as pltpu


def _round_up(x, m):
    return (x + m - 1) // m * m


def _vmem_budget_bytes():
    """3/4 of physical VMEM (headroom for compiler-internal scratch).
    Safe fallback of 48 MiB works on v7x (64 MiB/TC) as well as v5e/v6e (128 MiB)."""
    try:
        cap = pltpu.get_tpu_info().vmem_capacity_bytes
    except Exception:
        cap = 64 * 1024 * 1024
    return int(cap * 3 // 4)


def _pick_hidden_chunk(Hp, cap=1024):
    """Largest divisor of Hp that is a multiple of 256 (MXU-friendly on v6e/v7x),
    falling back to multiples of 128, capped at `cap`."""
    step = 256 if Hp % 256 == 0 else 128
    best = step
    t = step
    while t <= min(cap, Hp):
        if Hp % t == 0:
            best = t
        t += step
    return best


def _make_resident_kernel(explicit_identity):
    """1-D grid over token tiles; whole (padded) W1/W2 resident in VMEM."""

    def kernel(*refs):
        if explicit_identity:
            x_ref, id_ref, w1_ref, b1_ref, w2_ref, b2_ref, o_ref = refs
        else:
            x_ref, w1_ref, b1_ref, w2_ref, b2_ref, o_ref = refs
            id_ref = x_ref

        xb = x_ref[...].astype(jnp.bfloat16)                      # (tm, Dp)
        h = jnp.dot(xb, w1_ref[...], preferred_element_type=jnp.float32)   # (tm, Hp)
        h = jnp.maximum(h + b1_ref[...], 0.0)
        y = jnp.dot(h.astype(jnp.bfloat16), w2_ref[...],
                    preferred_element_type=jnp.float32)           # (tm, Dp)
        y = y + b2_ref[...]
        o_ref[...] = (id_ref[...].astype(jnp.float32) + y).astype(o_ref.dtype)

    return kernel


def _make_streamed_kernel(explicit_identity):
    """2-D grid (token tile i, hidden chunk k); W1/W2 streamed per k; f32 accumulator."""

    def kernel(*refs):
        if explicit_identity:
            x_ref, id_ref, w1_ref, b1_ref, w2_ref, b2_ref, o_ref, acc_ref = refs
        else:
            x_ref, w1_ref, b1_ref, w2_ref, b2_ref, o_ref, acc_ref = refs
            id_ref = x_ref

        k = pl.program_id(1)

        xb = x_ref[...].astype(jnp.bfloat16)                      # (tm, Dp)
        h = jnp.dot(xb, w1_ref[...], preferred_element_type=jnp.float32)   # (tm, th)
        h = jnp.maximum(h + b1_ref[...], 0.0)
        contrib = jnp.dot(h.astype(jnp.bfloat16), w2_ref[...],
                          preferred_element_type=jnp.float32)     # (tm, Dp)

        @pl.when(k == 0)
        def _first():
            acc_ref[...] = contrib          # write directly; no zero-init pass

        @pl.when(k != 0)
        def _accum():
            acc_ref[...] += contrib

        @pl.when(k == pl.num_programs(1) - 1)
        def _finalize():
            y = acc_ref[...] + b2_ref[...]
            o_ref[...] = (id_ref[...].astype(jnp.float32) + y).astype(o_ref.dtype)

    return kernel


def ffn_forward(x2d, w1p, b1p, w2p, b2p, identity2d=None, *, tm=512,
                force_streamed=False):
    """x2d: (T, D) tokens. w1p: (Dp, Hp) bf16, b1p: (1, Hp) f32, w2p: (Hp, Dp) bf16,
    b2p: (1, Dp) f32 — pre-padded to multiples of 128. Returns (T, D)."""
    T, D = x2d.shape
    Dp, Hp = w1p.shape

    # Token tile: multiple of 256; don't over-pad tiny inputs.
    tm = max(256, min(_round_up(tm, 256), _round_up(T, 256)))
    Tp = _round_up(T, tm)

    need_pad = (Tp != T) or (Dp != D)
    xp = x2d if not need_pad else jnp.pad(x2d, ((0, Tp - T), (0, Dp - D)))
    explicit_identity = identity2d is not None
    idp = None
    if explicit_identity:
        idp = identity2d if not need_pad else jnp.pad(identity2d,
                                                      ((0, Tp - T), (0, Dp - D)))

    budget = _vmem_budget_bytes()

    # VMEM estimate for the resident-weight path (double-buffered activation tiles,
    # 2x-buffered bf16 weights, biases, f32 fc1 intermediate as compiler scratch).
    n_act = 3 if explicit_identity else 2
    resident_bytes = (
        2 * n_act * tm * Dp * 4
        + 2 * 2 * Dp * Hp * 2
        + 2 * (Hp + Dp) * 4
        + tm * Hp * 4
    )
    use_resident = (not force_streamed) and (resident_bytes <= budget)

    args = [xp]
    if explicit_identity:
        args.append(idp)
    args += [w1p, b1p, w2p, b2p]

    if use_resident:
        # Whole weights as single blocks with constant index_map -> DMA'd once and
        # kept resident across token tiles; no reduction axis, no accumulator.
        in_specs = [pl.BlockSpec((tm, Dp), lambda i: (i, 0))]
        if explicit_identity:
            in_specs.append(pl.BlockSpec((tm, Dp), lambda i: (i, 0)))
        in_specs += [
            pl.BlockSpec((Dp, Hp), lambda i: (0, 0)),             # W1 (resident)
            pl.BlockSpec((1, Hp), lambda i: (0, 0)),              # b1
            pl.BlockSpec((Hp, Dp), lambda i: (0, 0)),             # W2 (resident)
            pl.BlockSpec((1, Dp), lambda i: (0, 0)),              # b2
        ]
        grid = (Tp // tm,)
        kernel = _make_resident_kernel(explicit_identity)
        out_specs = pl.BlockSpec((tm, Dp), lambda i: (i, 0))
        scratch = []
        semantics = ("parallel",)
    else:
        # Large stages / small-VMEM chips (e.g. v7x with big D,H): stream W1/W2 in
        # hidden chunks on a trailing reduction axis with an f32 VMEM accumulator.
        th = _pick_hidden_chunk(Hp)
        in_specs = [pl.BlockSpec((tm, Dp), lambda i, k: (i, 0))]
        if explicit_identity:
            in_specs.append(pl.BlockSpec((tm, Dp), lambda i, k: (i, 0)))
        in_specs += [
            pl.BlockSpec((Dp, th), lambda i, k: (0, k)),           # W1 chunk (streamed)
            pl.BlockSpec((1, th), lambda i, k: (0, k)),            # b1 chunk
            pl.BlockSpec((th, Dp), lambda i, k: (k, 0)),           # W2 chunk (streamed)
            pl.BlockSpec((1, Dp), lambda i, k: (0, 0)),            # b2
        ]
        grid = (Tp // tm, Hp // th)                                # reduction axis last
        kernel = _make_streamed_kernel(explicit_identity)
        out_specs = pl.BlockSpec((tm, Dp), lambda i, k: (i, 0))
        scratch = [pltpu.VMEM((tm, Dp), jnp.float32)]              # fc2 accumulator
        semantics = ("parallel", "arbitrary")
        # Note: pipeline_mode=pl.Buffered(3) on the weight-chunk specs can hide
        # chunk-boundary DMA when Hp/th is short; default depth-2 kept for safety.

    out = pl.pallas_call(
        kernel,
        out_shape=jax.ShapeDtypeStruct((Tp, Dp), x2d.dtype),
        grid_spec=pltpu.PrefetchScalarGridSpec(
            num_scalar_prefetch=0,
            grid=grid,
            in_specs=in_specs,
            out_specs=out_specs,
            scratch_shapes=scratch,
        ),
        compiler_params=pltpu.CompilerParams(
            dimension_semantics=semantics,
            vmem_limit_bytes=budget,
        ),
    )(*args)

    if need_pad:
        out = out[:T, :D]
    return out


class FFNPallas:
    """Deterministically-initialized FFN matching the PyTorch module (num_fcs=2,
    ReLU, ffn_drop=0, DropPath=Identity). Weights are padded / cast to bf16 ONCE
    at construction time, not on every call."""

    def __init__(self, embed_dims=32, feedforward_channels=64, key=None):
        if key is None:
            key = jax.random.PRNGKey(0)
        k1, k2, k3, k4 = jax.random.split(key, 4)
        D, H = embed_dims, feedforward_channels
        # nn.Linear default init: U(-1/sqrt(fan_in), 1/sqrt(fan_in))
        lim1 = 1.0 / (D ** 0.5)
        lim2 = 1.0 / (H ** 0.5)
        # reference copies (bf16 weights = MXU-native operands, f32 biases)
        self.w1 = jax.random.uniform(k1, (D, H), jnp.float32, -lim1, lim1).astype(jnp.bfloat16)
        self.b1 = jax.random.uniform(k2, (1, H), jnp.float32, -lim1, lim1)
        self.w2 = jax.random.uniform(k3, (H, D), jnp.float32, -lim2, lim2).astype(jnp.bfloat16)
        self.b2 = jax.random.uniform(k4, (1, D), jnp.float32, -lim2, lim2)
        self.embed_dims = D
        self.feedforward_channels = H
        # kernel-side pre-padded parameters (lane-dense multiples of 128)
        Dp, Hp = _round_up(D, 128), _round_up(H, 128)
        self._w1p = jnp.pad(self.w1, ((0, Dp - D), (0, Hp - H)))
        self._b1p = jnp.pad(self.b1, ((0, 0), (0, Hp - H)))
        self._w2p = jnp.pad(self.w2, ((0, Hp - H), (0, Dp - D)))
        self._b2p = jnp.pad(self.b2, ((0, 0), (0, Dp - D)))

    def __call__(self, x, identity=None, force_streamed=False):
        # x: (B, N, D)
        B, N, D = x.shape
        x2d = x.reshape(B * N, D)
        id2d = None if identity is None else identity.reshape(B * N, D)
        out2d = ffn_forward(x2d, self._w1p, self._b1p, self._w2p, self._b2p, id2d,
                            force_streamed=force_streamed)
        return out2d.reshape(B, N, D)


def ffn_reference(x, w1_bf16, b1, w2_bf16, b2, identity=None):
    """Pure-JAX reference with the same bf16-operand / f32-accumulation numerics."""
    xb = x.astype(jnp.bfloat16)
    h = jnp.dot(xb, w1_bf16, preferred_element_type=jnp.float32) + b1
    h = jnp.maximum(h, 0.0)
    y = jnp.dot(h.astype(jnp.bfloat16), w2_bf16, preferred_element_type=jnp.float32) + b2
    idn = x if identity is None else identity
    return idn.astype(jnp.float32) + y


if __name__ == "__main__":
    key = jax.random.PRNGKey(0)
    kx, kp, ki = jax.random.split(key, 3)

    batch, seq, embed_dims, hidden = 2, 8, 32, 64
    x = jax.random.normal(kx, (batch, seq, embed_dims), jnp.float32)

    ffn = FFNPallas(embed_dims=embed_dims, feedforward_channels=hidden, key=kp)

    x2d = x.reshape(-1, embed_dims)
    ref1 = ffn_reference(x2d, ffn.w1, ffn.b1, ffn.w2, ffn.b2).reshape(batch, seq, embed_dims)

    # 1) identity=None, resident-weight path (residual = x, fused in-kernel)
    out1 = jax.block_until_ready(ffn(x))
    assert out1.shape == (batch, seq, embed_dims)
    assert jnp.allclose(out1, ref1, atol=1e-2, rtol=1e-2), float(jnp.max(jnp.abs(out1 - ref1)))

    # 2) explicit-identity path, resident-weight path
    identity = jax.random.normal(ki, (batch, seq, embed_dims), jnp.float32)
    ref2 = ffn_reference(x2d, ffn.w1, ffn.b1, ffn.w2, ffn.b2,
                         identity=identity.reshape(-1, embed_dims)
                         ).reshape(batch, seq, embed_dims)
    out2 = jax.block_until_ready(ffn(x, identity=identity))
    assert jnp.allclose(out2, ref2, atol=1e-2, rtol=1e-2), float(jnp.max(jnp.abs(out2 - ref2)))

    # 3) streamed-weight fallback path (used for very large stages / v7x VMEM limits)
    out3 = jax.block_until_ready(ffn(x, identity=identity, force_streamed=True))
    assert jnp.allclose(out3, ref2, atol=1e-2, rtol=1e-2), float(jnp.max(jnp.abs(out3 - ref2)))

    print("KERNEL_OK")
</pallas_src>

<mosaic_0001>
module attributes {stable_mosaic.version = 11 : i64} {
  func.func @kernel(%arg0: i32, %arg1: memref<256x128xf32, #tpu.memory_space<vmem>>, %arg2: memref<128x128xbf16, #tpu.memory_space<vmem>>, %arg3: memref<1x128xf32, #tpu.memory_space<vmem>>, %arg4: memref<128x128xbf16, #tpu.memory_space<vmem>>, %arg5: memref<1x128xf32, #tpu.memory_space<vmem>>, %arg6: memref<256x128xf32, #tpu.memory_space<vmem>>) attributes {dimension_semantics = [#tpu.dimension_semantics<parallel>], iteration_bounds = array<i64: 1>, scalar_prefetch = 0 : i64, scratch_operands = 0 : i64, tpu.core_type = #tpu.core_type<tc>, window_params = [{transform_indices = @transform_0, window_bounds = array<i64: 256, 128>}, {pipeline_mode = #tpu.pipeline_mode<synchronous>, transform_indices = @transform_1, window_bounds = array<i64: 128, 128>}, {pipeline_mode = #tpu.pipeline_mode<synchronous>, transform_indices = @transform_2, window_bounds = array<i64: 1, 128>}, {pipeline_mode = #tpu.pipeline_mode<synchronous>, transform_indices = @transform_3, window_bounds = array<i64: 128, 128>}, {pipeline_mode = #tpu.pipeline_mode<synchronous>, transform_indices = @transform_4, window_bounds = array<i64: 1, 128>}, {transform_indices = @transform_5, window_bounds = array<i64: 256, 128>}]} {
    %c0 = arith.constant 0 : index
    %c0_0 = arith.constant 0 : index
    %0 = vector.load %arg1[%c0, %c0_0] : memref<256x128xf32, #tpu.memory_space<vmem>>, vector<256x128xf32>
    %1 = arith.truncf %0 : vector<256x128xf32> to vector<256x128xbf16>
    %c0_1 = arith.constant 0 : index
    %c0_2 = arith.constant 0 : index
    %2 = vector.load %arg2[%c0_1, %c0_2] : memref<128x128xbf16, #tpu.memory_space<vmem>>, vector<128x128xbf16>
    %cst = arith.constant dense<0.000000e+00> : vector<256x128xf32>
    %3 = tpu.matmul %1, %2, %cst {dimension_numbers = #tpu.dot_dimension_numbers<[1], [0], [0], [1], [0, 0, 1, 1], [], []>} : vector<256x128xbf16>, vector<128x128xbf16>, vector<256x128xf32> -> vector<256x128xf32>
    %c0_3 = arith.constant 0 : index
    %c0_4 = arith.constant 0 : index
    %4 = vector.load %arg3[%c0_3, %c0_4] : memref<1x128xf32, #tpu.memory_space<vmem>>, vector<1x128xf32>
    %5 = vector.broadcast %4 : vector<1x128xf32> to vector<256x128xf32>
    %6 = arith.addf %3, %5 : vector<256x128xf32>
    %cst_5 = arith.constant 0.000000e+00 : f32
    %7 = vector.broadcast %cst_5 : f32 to vector<256x128xf32>
    %8 = arith.maximumf %6, %7 : vector<256x128xf32>
    %9 = arith.truncf %8 : vector<256x128xf32> to vector<256x128xbf16>
    %c0_6 = arith.constant 0 : index
    %c0_7 = arith.constant 0 : index
    %10 = vector.load %arg4[%c0_6, %c0_7] : memref<128x128xbf16, #tpu.memory_space<vmem>>, vector<128x128xbf16>
    %cst_8 = arith.constant dense<0.000000e+00> : vector<256x128xf32>
    %11 = tpu.matmul %9, %10, %cst_8 {dimension_numbers = #tpu.dot_dimension_numbers<[1], [0], [0], [1], [0, 0, 1, 1], [], []>} : vector<256x128xbf16>, vector<128x128xbf16>, vector<256x128xf32> -> vector<256x128xf32>
    %c0_9 = arith.constant 0 : index
    %c0_10 = arith.constant 0 : index
    %12 = vector.load %arg5[%c0_9, %c0_10] : memref<1x128xf32, #tpu.memory_space<vmem>>, vector<1x128xf32>
    %13 = vector.broadcast %12 : vector<1x128xf32> to vector<256x128xf32>
    %14 = arith.addf %11, %13 : vector<256x128xf32>
    %c0_11 = arith.constant 0 : index
    %c0_12 = arith.constant 0 : index
    %15 = vector.load %arg1[%c0_11, %c0_12] : memref<256x128xf32, #tpu.memory_space<vmem>>, vector<256x128xf32>
    %16 = arith.addf %15, %14 : vector<256x128xf32>
    %c0_13 = arith.constant 0 : index
    %c0_14 = arith.constant 0 : index
    %17 = vector.load %arg6[%c0_13, %c0_14] : memref<256x128xf32, #tpu.memory_space<vmem>>, vector<256x128xf32>
    tpu.vector_store %arg6[%c0_13, %c0_14], %16 {strides = array<i32>} : memref<256x128xf32, #tpu.memory_space<vmem>>, vector<256x128xf32>,
    return
  }
  func.func @transform_0(%arg0: i32) -> (i32, i32) {
    %c0_i32 = arith.constant 0 : i32
    %c0_i32_0 = arith.constant 0 : i32
    return %arg0, %c0_i32 : i32, i32
  }
  func.func @transform_1(%arg0: i32) -> (i32, i32) {
    %c0_i32 = arith.constant 0 : i32
    %c0_i32_0 = arith.constant 0 : i32
    %c0_i32_1 = arith.constant 0 : i32
    return %c0_i32, %c0_i32_0 : i32, i32
  }
  func.func @transform_2(%arg0: i32) -> (i32, i32) {
    %c0_i32 = arith.constant 0 : i32
    %c0_i32_0 = arith.constant 0 : i32
    %c0_i32_1 = arith.constant 0 : i32
    return %c0_i32, %c0_i32_0 : i32, i32
  }
  func.func @transform_3(%arg0: i32) -> (i32, i32) {
    %c0_i32 = arith.constant 0 : i32
    %c0_i32_0 = arith.constant 0 : i32
    %c0_i32_1 = arith.constant 0 : i32
    return %c0_i32, %c0_i32_0 : i32, i32
  }
  func.func @transform_4(%arg0: i32) -> (i32, i32) {
    %c0_i32 = arith.constant 0 : i32
    %c0_i32_0 = arith.constant 0 : i32
    %c0_i32_1 = arith.constant 0 : i32
    return %c0_i32, %c0_i32_0 : i32, i32
  }
  func.func @transform_5(%arg0: i32) -> (i32, i32) {
    %c0_i32 = arith.constant 0 : i32
    %c0_i32_0 = arith.constant 0 : i32
    return %arg0, %c0_i32 : i32, i32
  }
}

</mosaic_0001>

<llo_original>
// kernel: tpu_custom_call.1
$region0: #{tpu_custom_call.1}
  #allocation0 [shape = 'u32[]', space=smem, size = 0x4, offset = 0x4, fixed_abs, tag = 'smem constant byte address 0x4 - core index']
  #allocation1 [shape = 'u32[144,128]{1,0:T(1,128)}', space=vmem, size = 0x12000, scoped, tag = 'internal scratch']
  %s0 = inlined_call_operand.hbm [shape: f32[256,128], index: 0, kind: input, shape index: {}]
  %s1 = inlined_call_operand.hbm [shape: bf16[128,128], index: 1, kind: input, shape index: {}]
  %s2 = inlined_call_operand.vmem [shape: f32[1,128], index: 2, kind: input, shape index: {}]
  %s3 = inlined_call_operand.hbm [shape: bf16[128,128], index: 3, kind: input, shape index: {}]
  %s4 = inlined_call_operand.vmem [shape: f32[1,128], index: 4, kind: input, shape index: {}]
  %s5 = inlined_call_operand.hbm [shape: f32[256,128], index: 5, kind: output, shape index: {}]
  %s6 = sld [smem:[#allocation0]]
  $region42: #{tpu_custom_call.1} parent=0
    _
  %s8 = ssub.s32 1, %s6
  %s9 = scalar_select 0, %s8, %s6
  $region1: #{tpu_custom_call.1} parent=0
    #allocation2 [shape = 'u8[131072]{0}', space=vmem, size = 0x20000, scoped, tag = 'input window, operand 0, single buffered']
    #allocation3 [shape = 's32[1]{0}', space=sflag, size = 0x4, scoped, tag = 'scoped memory for tpu_custom_call.1']
    #allocation4 [shape = 's32[1]{0}', space=sflag, size = 0x4, scoped, tag = 'scoped memory for tpu_custom_call.1']
    #allocation5 [shape = 'u8[32768]{0}', space=vmem, size = 0x8000, scoped, tag = 'input window, operand 1, single buffered']
    #allocation6 [shape = 's32[1]{0}', space=sflag, size = 0x4, scoped, tag = 'scoped memory for tpu_custom_call.1']
    #allocation7 [shape = 'u8[32768]{0}', space=vmem, size = 0x8000, scoped, tag = 'input window, operand 3, single buffered']
    #allocation8 [shape = 'u8[131072]{0}', space=vmem, size = 0x20000, scoped, tag = 'output window, operand 0, single buffered']
    %10 = vsyncpa [#allocation3], 0
    %11 = vsyncpa [#allocation6], 0
    %12 = vsyncpa [#allocation4], 0
    // Predicated region
    $region2: #{tpu_custom_call.1} parent=1 // pred_check
      _
    $region3: #{tpu_custom_call.1} parent=1 // pred_check_branch
      %14 = sbr.rel (0) target = $region5
    $region4: #{tpu_custom_call.1} parent=1 // pred_region
      %s16 = ssub.s32 4096, 4096
      %17 = vsyncadd [#allocation3], %s16
      %s18 = sshll.u32 [#allocation2], 4
      %s19 = int_to_ptr.vmem [resolvable:$true] %s18
      %24 = dma.hbm_to_vmem [thread:$0]  %s0, 4096, %s19, [#allocation3], 128, 128, 8
    $region5: #{tpu_custom_call.1} parent=1 // pred_fallthru
      _
    // Predicated region
    $region6: #{tpu_custom_call.1} parent=1 // pred_check
      _
    $region7: #{tpu_custom_call.1} parent=1 // pred_check_branch
      %26 = sbr.rel (0) target = $region9
    $region8: #{tpu_custom_call.1} parent=1 // pred_region
      %s28 = ssub.s32 1024, 1024
      %29 = vsyncadd [#allocation6], %s28
      %s30 = sshll.u32 [#allocation5], 4
      %s31 = int_to_ptr.vmem [resolvable:$true] %s30
      %36 = dma.hbm_to_vmem [thread:$0]  %s1, 1024, %s31, [#allocation6], 64, 64, 4
    $region9: #{tpu_custom_call.1} parent=1 // pred_fallthru
      _
    // Predicated region
    $region10: #{tpu_custom_call.1} parent=1 // pred_check
      _
    $region11: #{tpu_custom_call.1} parent=1 // pred_check_branch
      %38 = sbr.rel (0) target = $region13
    $region12: #{tpu_custom_call.1} parent=1 // pred_region
      _
    $region13: #{tpu_custom_call.1} parent=1 // pred_fallthru
      _
    // Predicated region
    $region14: #{tpu_custom_call.1} parent=1 // pred_check
      _
    $region15: #{tpu_custom_call.1} parent=1 // pred_check_branch
      %40 = sbr.rel (0) target = $region17
    $region16: #{tpu_custom_call.1} parent=1 // pred_region
      %s42 = ssub.s32 1024, 1024
      %43 = vsyncadd [#allocation6], %s42
      %s44 = sshll.u32 [#allocation7], 4
      %s45 = int_to_ptr.vmem [resolvable:$true] %s44
      %50 = dma.hbm_to_vmem [thread:$0]  %s3, 1024, %s45, [#allocation6], 64, 64, 4
    $region17: #{tpu_custom_call.1} parent=1 // pred_fallthru
      _
    // Predicated region
    $region18: #{tpu_custom_call.1} parent=1 // pred_check
      _
    $region19: #{tpu_custom_call.1} parent=1 // pred_check_branch
      %52 = sbr.rel (0) target = $region21
    $region20: #{tpu_custom_call.1} parent=1 // pred_region
      _
    $region21: #{tpu_custom_call.1} parent=1 // pred_fallthru
      _
    // Predicated region
    $region22: #{tpu_custom_call.1} parent=1 // pred_check
      _
    $region23: #{tpu_custom_call.1} parent=1 // pred_check_branch
      %54 = sbr.rel (0) target = $region25
    $region24: #{tpu_custom_call.1} parent=1 // pred_region
      %55 = dma.done [#allocation3], 4096
    $region25: #{tpu_custom_call.1} parent=1 // pred_fallthru
      _
    // Predicated region
    $region26: #{tpu_custom_call.1} parent=1 // pred_check
      _
    $region27: #{tpu_custom_call.1} parent=1 // pred_check_branch
      %57 = sbr.rel (0) target = $region29
    $region28: #{tpu_custom_call.1} parent=1 // pred_region
      %58 = dma.done [#allocation6], 1024
    $region29: #{tpu_custom_call.1} parent=1 // pred_fallthru
      _
    // Predicated region
    $region30: #{tpu_custom_call.1} parent=1 // pred_check
      _
    $region31: #{tpu_custom_call.1} parent=1 // pred_check_branch
      %60 = sbr.rel (0) target = $region33
    $region32: #{tpu_custom_call.1} parent=1 // pred_region
      %61 = dma.done [#allocation6], 1024
    $region33: #{tpu_custom_call.1} parent=1 // pred_fallthru
      _
    %v63 = vld [vmem:[#allocation2] sm:$0xff]
    %v64 = vld [vmem:[#allocation2 + $0x8] sm:$0xff]
    %v65 = vld [vmem:[#allocation2 + $0x10] sm:$0xff]
    %v66 = vld [vmem:[#allocation2 + $0x18] sm:$0xff]
    %v67 = vld [vmem:[#allocation2 + $0x20] sm:$0xff]
    %v68 = vld [vmem:[#allocation2 + $0x28] sm:$0xff]
    %v69 = vld [vmem:[#allocation2 + $0x30] sm:$0xff]
    %v70 = vld [vmem:[#allocation2 + $0x38] sm:$0xff]
    %v71 = vld [vmem:[#allocation2 + $0x40] sm:$0xff]
    %v72 = vld [vmem:[#allocation2 + $0x48] sm:$0xff]
    %v73 = vld [vmem:[#allocation2 + $0x50] sm:$0xff]
    %v74 = vld [vmem:[#allocation2 + $0x58] sm:$0xff]
    %v75 = vld [vmem:[#allocation2 + $0x60] sm:$0xff]
    %v76 = vld [vmem:[#allocation2 + $0x68] sm:$0xff]
    %v77 = vld [vmem:[#allocation2 + $0x70] sm:$0xff]
    %v78 = vld [vmem:[#allocation2 + $0x78] sm:$0xff]
    %v79 = vld [vmem:[#allocation2 + $0x80] sm:$0xff]
    %v80 = vld [vmem:[#allocation2 + $0x88] sm:$0xff]
    %v81 = vld [vmem:[#allocation2 + $0x90] sm:$0xff]
    %v82 = vld [vmem:[#allocation2 + $0x98] sm:$0xff]
    %v83 = vld [vmem:[#allocation2 + $0xa0] sm:$0xff]
    %v84 = vld [vmem:[#allocation2 + $0xa8] sm:$0xff]
    %v85 = vld [vmem:[#allocation2 + $0xb0] sm:$0xff]
    %v86 = vld [vmem:[#allocation2 + $0xb8] sm:$0xff]
    %v87 = vld [vmem:[#allocation2 + $0xc0] sm:$0xff]
    %v88 = vld [vmem:[#allocation2 + $0xc8] sm:$0xff]
    %v89 = vld [vmem:[#allocation2 + $0xd0] sm:$0xff]
    %v90 = vld [vmem:[#allocation2 + $0xd8] sm:$0xff]
    %v91 = vld [vmem:[#allocation2 + $0xe0] sm:$0xff]
    %v92 = vld [vmem:[#allocation2 + $0xe8] sm:$0xff]
    %v93 = vld [vmem:[#allocation2 + $0xf0] sm:$0xff]
    %v94 = vld [vmem:[#allocation2 + $0xf8] sm:$0xff]
    %v95 = vpack.c.bf16 %v64, %v63
    %v96 = vpack.c.bf16 %v66, %v65
    %v97 = vpack.c.bf16 %v68, %v67
    %v98 = vpack.c.bf16 %v70, %v69
    %v99 = vpack.c.bf16 %v72, %v71
    %v100 = vpack.c.bf16 %v74, %v73
    %v101 = vpack.c.bf16 %v76, %v75
    %v102 = vpack.c.bf16 %v78, %v77
    %v103 = vpack.c.bf16 %v80, %v79
    %v104 = vpack.c.bf16 %v82, %v81
    %v105 = vpack.c.bf16 %v84, %v83
    %v106 = vpack.c.bf16 %v86, %v85
    %v107 = vpack.c.bf16 %v88, %v87
    %v108 = vpack.c.bf16 %v90, %v89
    %v109 = vpack.c.bf16 %v92, %v91
    %v110 = vpack.c.bf16 %v94, %v93
    %v111 = vld [vmem:[#allocation5] sm:$0xf]
    %v112 = vld [vmem:[#allocation5 + $0x4] sm:$0xf]
    %v113 = vld [vmem:[#allocation5 + $0x8] sm:$0xf]
    %v114 = vld [vmem:[#allocation5 + $0xc] sm:$0xf]
    %v115 = vld [vmem:[#allocation5 + $0x10] sm:$0xf]
    %v116 = vld [vmem:[#allocation5 + $0x14] sm:$0xf]
    %v117 = vld [vmem:[#allocation5 + $0x18] sm:$0xf]
    %v118 = vld [vmem:[#allocation5 + $0x1c] sm:$0xf]
    %v119 = vld [vmem:[#allocation5 + $0x20] sm:$0xf]
    %v120 = vld [vmem:[#allocation5 + $0x24] sm:$0xf]
    %v121 = vld [vmem:[#allocation5 + $0x28] sm:$0xf]
    %v122 = vld [vmem:[#allocation5 + $0x2c] sm:$0xf]
    %v123 = vld [vmem:[#allocation5 + $0x30] sm:$0xf]
    %v124 = vld [vmem:[#allocation5 + $0x34] sm:$0xf]
    %v125 = vld [vmem:[#allocation5 + $0x38] sm:$0xf]
    %v126 = vld [vmem:[#allocation5 + $0x3c] sm:$0xf]
    %v127 = vld [vmem:[%s2] sm:$0x1]
    %v129 = vlaneseq
    %v130 = vshrl.u32 %v129, 7
    %v131 = vsub.s32 0, %v130
    %v132 = vrot.slane %v127, %v131
    %v150 = vunpack.c.l.b16 %v111
    %v151 = vunpack.c.l.b16 %v112
    %v152 = vunpack.c.l.b16 %v113
    %v153 = vunpack.c.l.b16 %v114
    %v154 = vunpack.c.l.b16 %v115
    %v155 = vunpack.c.l.b16 %v116
    %v156 = vunpack.c.l.b16 %v117
    %v157 = vunpack.c.l.b16 %v118
    %v158 = vunpack.c.l.b16 %v119
    %v159 = vunpack.c.l.b16 %v120
    %v160 = vunpack.c.l.b16 %v121
    %v161 = vunpack.c.l.b16 %v122
    %v162 = vunpack.c.l.b16 %v123
    %v163 = vunpack.c.l.b16 %v124
    %v164 = vunpack.c.l.b16 %v125
    %v165 = vunpack.c.l.b16 %v126
    %v166 = vpack.c.b16 %v151, %v150
    %v167 = vpack.c.b16 %v153, %v152
    %v168 = vpack.c.b16 %v155, %v154
    %v169 = vpack.c.b16 %v157, %v156
    %v170 = vpack.c.b16 %v159, %v158
    %v171 = vpack.c.b16 %v161, %v160
    %v172 = vpack.c.b16 %v163, %v162
    %v173 = vpack.c.b16 %v165, %v164
    %182 = vmatprep.subr.bf16.mxu0 0
    %183 = vmatpush1.bf16.msra.mxu0 %v166
    %184 = vmatprep.subr.bf16.mxu0 0
    %185 = vmatpush1.bf16.msra.mxu0 %v167
    %186 = vmatprep.subr.bf16.mxu0 0
    %187 = vmatpush1.bf16.msra.mxu0 %v168
    %188 = vmatprep.subr.bf16.mxu0 0
    %189 = vmatpush1.bf16.msra.mxu0 %v169
    %190 = vmatprep.subr.bf16.mxu0 0
    %191 = vmatpush1.bf16.msra.mxu0 %v170
    %192 = vmatprep.subr.bf16.mxu0 0
    %193 = vmatpush1.bf16.msra.mxu0 %v171
    %194 = vmatprep.subr.bf16.mxu0 0
    %195 = vmatpush1.bf16.msra.mxu0 %v172
    %196 = vmatprep.subr.bf16.mxu0 0
    %197 = vmatpush1.bf16.msra.mxu0 %v173
    %198 = vmatprep.subr.bf16.mxu0 0
    %199 = vmatpush1.bf16.msra.mxu0 0
    %200 = vmatprep.subr.bf16.mxu0 0
    %201 = vmatpush1.bf16.msra.mxu0 0
    %202 = vmatprep.subr.bf16.mxu0 0
    %203 = vmatpush1.bf16.msra.mxu0 0
    %204 = vmatprep.subr.bf16.mxu0 0
    %205 = vmatpush1.bf16.msra.mxu0 0
    %206 = vmatprep.subr.bf16.mxu0 0
    %207 = vmatpush1.bf16.msra.mxu0 0
    %208 = vmatprep.subr.bf16.mxu0 0
    %209 = vmatpush1.bf16.msra.mxu0 0
    %210 = vmatprep.subr.bf16.mxu0 0
    %211 = vmatpush1.bf16.msra.mxu0 0
    %212 = vmatprep.subr.bf16.mxu0 0
    %213 = vmatpush1.bf16.msra.mxu0 0
    %214 = vmatprep.mubr.bf16.mxu0 0
    %215 = vmatmul.mubr.bf16.gmra.mrb[0].mxu0 %v95
    %v216 = vpop.f32.mrb[0].mxu0
    %v217 = vadd.f32 %v132, %v216
    %v218 = vpop.f32.mrb[0].mxu0
    %v219 = vpop.f32.mrb[0].mxu0
    %v220 = vadd.f32 %v132, %v219
    %v221 = vpop.f32.mrb[0].mxu0
    %222 = vmatprep.mubr.bf16.mxu0 0
    %223 = vmatmul.mubr.bf16.gmra.mrb[0].mxu0 %v96
    %v224 = vpop.f32.mrb[0].mxu0
    %v225 = vadd.f32 %v132, %v224
    %v226 = vpop.f32.mrb[0].mxu0
    %v227 = vpop.f32.mrb[0].mxu0
    %v228 = vadd.f32 %v132, %v227
    %v229 = vpop.f32.mrb[0].mxu0
    %230 = vmatprep.mubr.bf16.mxu0 0
    %231 = vmatmul.mubr.bf16.gmra.mrb[0].mxu0 %v97
    %v232 = vpop.f32.mrb[0].mxu0
    %v233 = vadd.f32 %v132, %v232
    %v234 = vpop.f32.mrb[0].mxu0
    %v235 = vpop.f32.mrb[0].mxu0
    %v236 = vadd.f32 %v132, %v235
    %v237 = vpop.f32.mrb[0].mxu0
    %238 = vmatprep.mubr.bf16.mxu0 0
    %239 = vmatmul.mubr.bf16.gmra.mrb[0].mxu0 %v98
    %v240 = vpop.f32.mrb[0].mxu0
    %v241 = vadd.f32 %v132, %v240
    %v242 = vpop.f32.mrb[0].mxu0
    %v243 = vpop.f32.mrb[0].mxu0
    %v244 = vadd.f32 %v132, %v243
    %v245 = vpop.f32.mrb[0].mxu0
    %246 = vmatprep.mubr.bf16.mxu0 0
    %247 = vmatmul.mubr.bf16.gmra.mrb[0].mxu0 %v99
    %v248 = vpop.f32.mrb[0].mxu0
    %v249 = vadd.f32 %v132, %v248
    %v250 = vpop.f32.mrb[0].mxu0
    %v251 = vpop.f32.mrb[0].mxu0
    %v252 = vadd.f32 %v132, %v251
    %v253 = vpop.f32.mrb[0].mxu0
    %254 = vmatprep.mubr.bf16.mxu0 0
    %255 = vmatmul.mubr.bf16.gmra.mrb[0].mxu0 %v100
    %v256 = vpop.f32.mrb[0].mxu0
    %v257 = vadd.f32 %v132, %v256
    %v258 = vpop.f32.mrb[0].mxu0
    %v259 = vpop.f32.mrb[0].mxu0
    %v260 = vadd.f32 %v132, %v259
    %v261 = vpop.f32.mrb[0].mxu0
    %262 = vmatprep.mubr.bf16.mxu0 0
    %263 = vmatmul.mubr.bf16.gmra.mrb[0].mxu0 %v101
    %v264 = vpop.f32.mrb[0].mxu0
    %v265 = vadd.f32 %v132, %v264
    %v266 = vpop.f32.mrb[0].mxu0
    %v267 = vpop.f32.mrb[0].mxu0
    %v268 = vadd.f32 %v132, %v267
    %v269 = vpop.f32.mrb[0].mxu0
    %270 = vmatprep.mubr.bf16.mxu0 0
    %271 = vmatmul.mubr.bf16.gmra.mrb[0].mxu0 %v102
    %v272 = vpop.f32.mrb[0].mxu0
    %v273 = vadd.f32 %v132, %v272
    %v274 = vpop.f32.mrb[0].mxu0
    %v275 = vpop.f32.mrb[0].mxu0
    %v276 = vadd.f32 %v132, %v275
    %v277 = vpop.f32.mrb[0].mxu0
    %278 = vmatprep.mubr.bf16.mxu0 0
    %279 = vmatmul.mubr.bf16.gmra.mrb[0].mxu0 %v103
    %v280 = vpop.f32.mrb[0].mxu0
    %v281 = vadd.f32 %v132, %v280
    %v282 = vpop.f32.mrb[0].mxu0
    %v283 = vpop.f32.mrb[0].mxu0
    %v284 = vadd.f32 %v132, %v283
    %v285 = vpop.f32.mrb[0].mxu0
    %286 = vmatprep.mubr.bf16.mxu0 0
    %287 = vmatmul.mubr.bf16.gmra.mrb[0].mxu0 %v104
    %v288 = vpop.f32.mrb[0].mxu0
    %v289 = vadd.f32 %v132, %v288
    %v290 = vpop.f32.mrb[0].mxu0
    %v291 = vpop.f32.mrb[0].mxu0
    %v292 = vadd.f32 %v132, %v291
    %v293 = vpop.f32.mrb[0].mxu0
    %294 = vmatprep.mubr.bf16.mxu0 0
    %295 = vmatmul.mubr.bf16.gmra.mrb[0].mxu0 %v105
    %v296 = vpop.f32.mrb[0].mxu0
    %v297 = vadd.f32 %v132, %v296
    %v298 = vpop.f32.mrb[0].mxu0
    %v299 = vpop.f32.mrb[0].mxu0
    %v300 = vadd.f32 %v132, %v299
    %v301 = vpop.f32.mrb[0].mxu0
    %302 = vmatprep.mubr.bf16.mxu0 0
    %303 = vmatmul.mubr.bf16.gmra.mrb[0].mxu0 %v106
    %v304 = vpop.f32.mrb[0].mxu0
    %v305 = vadd.f32 %v132, %v304
    %v306 = vpop.f32.mrb[0].mxu0
    %v307 = vpop.f32.mrb[0].mxu0
    %v308 = vadd.f32 %v132, %v307
    %v309 = vpop.f32.mrb[0].mxu0
    %310 = vmatprep.mubr.bf16.mxu0 0
    %311 = vmatmul.mubr.bf16.gmra.mrb[0].mxu0 %v107
    %v312 = vpop.f32.mrb[0].mxu0
    %v313 = vadd.f32 %v132, %v312
    %v314 = vpop.f32.mrb[0].mxu0
    %v315 = vpop.f32.mrb[0].mxu0
    %v316 = vadd.f32 %v132, %v315
    %v317 = vpop.f32.mrb[0].mxu0
    %318 = vmatprep.mubr.bf16.mxu0 0
    %319 = vmatmul.mubr.bf16.gmra.mrb[0].mxu0 %v108
    %v320 = vpop.f32.mrb[0].mxu0
    %v321 = vadd.f32 %v132, %v320
    %v322 = vpop.f32.mrb[0].mxu0
    %v323 = vpop.f32.mrb[0].mxu0
    %v324 = vadd.f32 %v132, %v323
    %v325 = vpop.f32.mrb[0].mxu0
    %326 = vmatprep.mubr.bf16.mxu0 0
    %327 = vmatmul.mubr.bf16.gmra.mrb[0].mxu0 %v109
    %v328 = vpop.f32.mrb[0].mxu0
    %v329 = vadd.f32 %v132, %v328
    %v330 = vpop.f32.mrb[0].mxu0
    %v331 = vpop.f32.mrb[0].mxu0
    %v332 = vadd.f32 %v132, %v331
    %v333 = vpop.f32.mrb[0].mxu0
    %334 = vmatprep.mubr.bf16.mxu0 0
    %335 = vmatmul.mubr.bf16.gmra.mrb[0].mxu0 %v110
    %v336 = vpop.f32.mrb[0].mxu0
    %v337 = vadd.f32 %v132, %v336
    %v338 = vpop.f32.mrb[0].mxu0
    %v339 = vpop.f32.mrb[0].mxu0
    %v340 = vadd.f32 %v132, %v339
    %v341 = vpop.f32.mrb[0].mxu0
    %342 = vdwg.mxu0
    %v343 = vmax.f32 %v217, 0.0
    %v344 = vmax.f32 %v220, 0.0
    %v345 = vmax.f32 %v225, 0.0
    %v346 = vmax.f32 %v228, 0.0
    %v347 = vmax.f32 %v233, 0.0
    %v348 = vmax.f32 %v236, 0.0
    %v349 = vmax.f32 %v241, 0.0
    %v350 = vmax.f32 %v244, 0.0
    %v351 = vmax.f32 %v249, 0.0
    %v352 = vmax.f32 %v252, 0.0
    %v353 = vmax.f32 %v257, 0.0
    %v354 = vmax.f32 %v260, 0.0
    %v355 = vmax.f32 %v265, 0.0
    %v356 = vmax.f32 %v268, 0.0
    %v357 = vmax.f32 %v273, 0.0
    %v358 = vmax.f32 %v276, 0.0
    %v359 = vmax.f32 %v281, 0.0
    %v360 = vmax.f32 %v284, 0.0
    %v361 = vmax.f32 %v289, 0.0
    %v362 = vmax.f32 %v292, 0.0
    %v363 = vmax.f32 %v297, 0.0
    %v364 = vmax.f32 %v300, 0.0
    %v365 = vmax.f32 %v305, 0.0
    %v366 = vmax.f32 %v308, 0.0
    %v367 = vmax.f32 %v313, 0.0
    %v368 = vmax.f32 %v316, 0.0
    %v369 = vmax.f32 %v321, 0.0
    %v370 = vmax.f32 %v324, 0.0
    %v371 = vmax.f32 %v329, 0.0
    %v372 = vmax.f32 %v332, 0.0
    %v373 = vmax.f32 %v337, 0.0
    %v374 = vmax.f32 %v340, 0.0
    %v375 = vpack.c.bf16 %v344, %v343
    %v376 = vpack.c.bf16 %v346, %v345
    %v377 = vpack.c.bf16 %v348, %v347
    %v378 = vpack.c.bf16 %v350, %v349
    %v379 = vpack.c.bf16 %v352, %v351
    %v380 = vpack.c.bf16 %v354, %v353
    %v381 = vpack.c.bf16 %v356, %v355
    %v382 = vpack.c.bf16 %v358, %v357
    %v383 = vpack.c.bf16 %v360, %v359
    %v384 = vpack.c.bf16 %v362, %v361
    %v385 = vpack.c.bf16 %v364, %v363
    %v386 = vpack.c.bf16 %v366, %v365
    %v387 = vpack.c.bf16 %v368, %v367
    %v388 = vpack.c.bf16 %v370, %v369
    %v389 = vpack.c.bf16 %v372, %v371
    %v390 = vpack.c.bf16 %v374, %v373
    %v391 = vld [vmem:[#allocation7] sm:$0xf]
    %v392 = vld [vmem:[#allocation7 + $0x4] sm:$0xf]
    %v393 = vld [vmem:[#allocation7 + $0x8] sm:$0xf]
    %v394 = vld [vmem:[#allocation7 + $0xc] sm:$0xf]
    %v395 = vld [vmem:[#allocation7 + $0x10] sm:$0xf]
    %v396 = vld [vmem:[#allocation7 + $0x14] sm:$0xf]
    %v397 = vld [vmem:[#allocation7 + $0x18] sm:$0xf]
    %v398 = vld [vmem:[#allocation7 + $0x1c] sm:$0xf]
    %v399 = vld [vmem:[#allocation7 + $0x20] sm:$0xf]
    %v400 = vld [vmem:[#allocation7 + $0x24] sm:$0xf]
    %v401 = vld [vmem:[#allocation7 + $0x28] sm:$0xf]
    %v402 = vld [vmem:[#allocation7 + $0x2c] sm:$0xf]
    %v403 = vld [vmem:[#allocation7 + $0x30] sm:$0xf]
    %v404 = vld [vmem:[#allocation7 + $0x34] sm:$0xf]
    %v405 = vld [vmem:[#allocation7 + $0x38] sm:$0xf]
    %v406 = vld [vmem:[#allocation7 + $0x3c] sm:$0xf]
    %v407 = vld [vmem:[%s4] sm:$0x1]
    %v409 = vlaneseq
    %v410 = vshrl.u32 %v409, 7
    %v411 = vsub.s32 0, %v410
    %v412 = vrot.slane %v407, %v411
    %v430 = vunpack.c.l.b16 %v391
    %v431 = vunpack.c.l.b16 %v392
    %v432 = vunpack.c.l.b16 %v393
    %v433 = vunpack.c.l.b16 %v394
    %v434 = vunpack.c.l.b16 %v395
    %v435 = vunpack.c.l.b16 %v396
    %v436 = vunpack.c.l.b16 %v397
    %v437 = vunpack.c.l.b16 %v398
    %v438 = vunpack.c.l.b16 %v399
    %v439 = vunpack.c.l.b16 %v400
    %v440 = vunpack.c.l.b16 %v401
    %v441 = vunpack.c.l.b16 %v402
    %v442 = vunpack.c.l.b16 %v403
    %v443 = vunpack.c.l.b16 %v404
    %v444 = vunpack.c.l.b16 %v405
    %v445 = vunpack.c.l.b16 %v406
    %v446 = vpack.c.b16 %v431, %v430
    %v447 = vpack.c.b16 %v433, %v432
    %v448 = vpack.c.b16 %v435, %v434
    %v449 = vpack.c.b16 %v437, %v436
    %v450 = vpack.c.b16 %v439, %v438
    %v451 = vpack.c.b16 %v441, %v440
    %v452 = vpack.c.b16 %v443, %v442
    %v453 = vpack.c.b16 %v445, %v444
    %462 = vmatprep.subr.bf16.mxu0 0
    %463 = vmatpush1.bf16.msra.mxu0 %v446
    %464 = vmatprep.subr.bf16.mxu0 0
    %465 = vmatpush1.bf16.msra.mxu0 %v447
    %466 = vmatprep.subr.bf16.mxu0 0
    %467 = vmatpush1.bf16.msra.mxu0 %v448
    %468 = vmatprep.subr.bf16.mxu0 0
    %469 = vmatpush1.bf16.msra.mxu0 %v449
    %470 = vmatprep.subr.bf16.mxu0 0
    %471 = vmatpush1.bf16.msra.mxu0 %v450
    %472 = vmatprep.subr.bf16.mxu0 0
    %473 = vmatpush1.bf16.msra.mxu0 %v451
    %474 = vmatprep.subr.bf16.mxu0 0
    %475 = vmatpush1.bf16.msra.mxu0 %v452
    %476 = vmatprep.subr.bf16.mxu0 0
    %477 = vmatpush1.bf16.msra.mxu0 %v453
    %478 = vmatprep.subr.bf16.mxu0 0
    %479 = vmatpush1.bf16.msra.mxu0 0
    %480 = vmatprep.subr.bf16.mxu0 0
    %481 = vmatpush1.bf16.msra.mxu0 0
    %482 = vmatprep.subr.bf16.mxu0 0
    %483 = vmatpush1.bf16.msra.mxu0 0
    %484 = vmatprep.subr.bf16.mxu0 0
    %485 = vmatpush1.bf16.msra.mxu0 0
    %486 = vmatprep.subr.bf16.mxu0 0
    %487 = vmatpush1.bf16.msra.mxu0 0
    %488 = vmatprep.subr.bf16.mxu0 0
    %489 = vmatpush1.bf16.msra.mxu0 0
    %490 = vmatprep.subr.bf16.mxu0 0
    %491 = vmatpush1.bf16.msra.mxu0 0
    %492 = vmatprep.subr.bf16.mxu0 0
    %493 = vmatpush1.bf16.msra.mxu0 0
    %494 = vmatprep.mubr.bf16.mxu0 0
    %495 = vmatmul.mubr.bf16.gmra.mrb[0].mxu0 %v375
    %v496 = vpop.f32.mrb[0].mxu0
    %v497 = vadd.f32 %v412, %v496
    %v498 = vpop.f32.mrb[0].mxu0
    %v499 = vpop.f32.mrb[0].mxu0
    %v500 = vadd.f32 %v412, %v499
    %v501 = vpop.f32.mrb[0].mxu0
    %502 = vmatprep.mubr.bf16.mxu0 0
    %503 = vmatmul.mubr.bf16.gmra.mrb[0].mxu0 %v376
    %v504 = vpop.f32.mrb[0].mxu0
    %v505 = vadd.f32 %v412, %v504
    %v506 = vpop.f32.mrb[0].mxu0
    %v507 = vpop.f32.mrb[0].mxu0
    %v508 = vadd.f32 %v412, %v507
    %v509 = vpop.f32.mrb[0].mxu0
    %510 = vmatprep.mubr.bf16.mxu0 0
    %511 = vmatmul.mubr.bf16.gmra.mrb[0].mxu0 %v377
    %v512 = vpop.f32.mrb[0].mxu0
    %v513 = vadd.f32 %v412, %v512
    %v514 = vpop.f32.mrb[0].mxu0
    %v515 = vpop.f32.mrb[0].mxu0
    %v516 = vadd.f32 %v412, %v515
    %v517 = vpop.f32.mrb[0].mxu0
    %518 = vmatprep.mubr.bf16.mxu0 0
    %519 = vmatmul.mubr.bf16.gmra.mrb[0].mxu0 %v378
    %v520 = vpop.f32.mrb[0].mxu0
    %v521 = vadd.f32 %v412, %v520
    %v522 = vpop.f32.mrb[0].mxu0
    %v523 = vpop.f32.mrb[0].mxu0
    %v524 = vadd.f32 %v412, %v523
    %v525 = vpop.f32.mrb[0].mxu0
    %526 = vmatprep.mubr.bf16.mxu0 0
    %527 = vmatmul.mubr.bf16.gmra.mrb[0].mxu0 %v379
    %v528 = vpop.f32.mrb[0].mxu0
    %v529 = vadd.f32 %v412, %v528
    %v530 = vpop.f32.mrb[0].mxu0
    %v531 = vpop.f32.mrb[0].mxu0
    %v532 = vadd.f32 %v412, %v531
    %v533 = vpop.f32.mrb[0].mxu0
    %534 = vmatprep.mubr.bf16.mxu0 0
    %535 = vmatmul.mubr.bf16.gmra.mrb[0].mxu0 %v380
    %v536 = vpop.f32.mrb[0].mxu0
    %v537 = vadd.f32 %v412, %v536
    %v538 = vpop.f32.mrb[0].mxu0
    %v539 = vpop.f32.mrb[0].mxu0
    %v540 = vadd.f32 %v412, %v539
    %v541 = vpop.f32.mrb[0].mxu0
    %542 = vmatprep.mubr.bf16.mxu0 0
    %543 = vmatmul.mubr.bf16.gmra.mrb[0].mxu0 %v381
    %v544 = vpop.f32.mrb[0].mxu0
    %v545 = vadd.f32 %v412, %v544
    %v546 = vpop.f32.mrb[0].mxu0
    %v547 = vpop.f32.mrb[0].mxu0
    %v548 = vadd.f32 %v412, %v547
    %v549 = vpop.f32.mrb[0].mxu0
    %550 = vmatprep.mubr.bf16.mxu0 0
    %551 = vmatmul.mubr.bf16.gmra.mrb[0].mxu0 %v382
    %v552 = vpop.f32.mrb[0].mxu0
    %v553 = vadd.f32 %v412, %v552
    %v554 = vpop.f32.mrb[0].mxu0
    %v555 = vpop.f32.mrb[0].mxu0
    %v556 = vadd.f32 %v412, %v555
    %v557 = vpop.f32.mrb[0].mxu0
    %558 = vmatprep.mubr.bf16.mxu0 0
    %559 = vmatmul.mubr.bf16.gmra.mrb[0].mxu0 %v383
    %v560 = vpop.f32.mrb[0].mxu0
    %v561 = vadd.f32 %v412, %v560
    %v562 = vpop.f32.mrb[0].mxu0
    %v563 = vpop.f32.mrb[0].mxu0
    %v564 = vadd.f32 %v412, %v563
    %v565 = vpop.f32.mrb[0].mxu0
    %566 = vmatprep.mubr.bf16.mxu0 0
    %567 = vmatmul.mubr.bf16.gmra.mrb[0].mxu0 %v384
    %v568 = vpop.f32.mrb[0].mxu0
    %v569 = vadd.f32 %v412, %v568
    %v570 = vpop.f32.mrb[0].mxu0
    %v571 = vpop.f32.mrb[0].mxu0
    %v572 = vadd.f32 %v412, %v571
    %v573 = vpop.f32.mrb[0].mxu0
    %574 = vmatprep.mubr.bf16.mxu0 0
    %575 = vmatmul.mubr.bf16.gmra.mrb[0].mxu0 %v385
    %v576 = vpop.f32.mrb[0].mxu0
    %v577 = vadd.f32 %v412, %v576
    %v578 = vpop.f32.mrb[0].mxu0
    %v579 = vpop.f32.mrb[0].mxu0
    %v580 = vadd.f32 %v412, %v579
    %v581 = vpop.f32.mrb[0].mxu0
    %582 = vmatprep.mubr.bf16.mxu0 0
    %583 = vmatmul.mubr.bf16.gmra.mrb[0].mxu0 %v386
    %v584 = vpop.f32.mrb[0].mxu0
    %v585 = vadd.f32 %v412, %v584
    %v586 = vpop.f32.mrb[0].mxu0
    %v587 = vpop.f32.mrb[0].mxu0
    %v588 = vadd.f32 %v412, %v587
    %v589 = vpop.f32.mrb[0].mxu0
    %590 = vmatprep.mubr.bf16.mxu0 0
    %591 = vmatmul.mubr.bf16.gmra.mrb[0].mxu0 %v387
    %v592 = vpop.f32.mrb[0].mxu0
    %v593 = vadd.f32 %v412, %v592
    %v594 = vpop.f32.mrb[0].mxu0
    %v595 = vpop.f32.mrb[0].mxu0
    %v596 = vadd.f32 %v412, %v595
    %v597 = vpop.f32.mrb[0].mxu0
    %598 = vmatprep.mubr.bf16.mxu0 0
    %599 = vmatmul.mubr.bf16.gmra.mrb[0].mxu0 %v388
    %v600 = vpop.f32.mrb[0].mxu0
    %v601 = vadd.f32 %v412, %v600
    %v602 = vpop.f32.mrb[0].mxu0
    %v603 = vpop.f32.mrb[0].mxu0
    %v604 = vadd.f32 %v412, %v603
    %v605 = vpop.f32.mrb[0].mxu0
    %606 = vmatprep.mubr.bf16.mxu0 0
    %607 = vmatmul.mubr.bf16.gmra.mrb[0].mxu0 %v389
    %v608 = vpop.f32.mrb[0].mxu0
    %v609 = vadd.f32 %v412, %v608
    %v610 = vpop.f32.mrb[0].mxu0
    %v611 = vpop.f32.mrb[0].mxu0
    %v612 = vadd.f32 %v412, %v611
    %v613 = vpop.f32.mrb[0].mxu0
    %614 = vmatprep.mubr.bf16.mxu0 0
    %615 = vmatmul.mubr.bf16.gmra.mrb[0].mxu0 %v390
    %v616 = vpop.f32.mrb[0].mxu0
    %v617 = vadd.f32 %v412, %v616
    %v618 = vpop.f32.mrb[0].mxu0
    %v619 = vpop.f32.mrb[0].mxu0
    %v620 = vadd.f32 %v412, %v619
    %v621 = vpop.f32.mrb[0].mxu0
    %622 = vdwg.mxu0
    %v623 = vadd.f32 %v63, %v497
    %v624 = vadd.f32 %v64, %v500
    %v625 = vadd.f32 %v65, %v505
    %v626 = vadd.f32 %v66, %v508
    %v627 = vadd.f32 %v67, %v513
    %v628 = vadd.f32 %v68, %v516
    %v629 = vadd.f32 %v69, %v521
    %v630 = vadd.f32 %v70, %v524
    %v631 = vadd.f32 %v71, %v529
    %v632 = vadd.f32 %v72, %v532
    %v633 = vadd.f32 %v73, %v537
    %v634 = vadd.f32 %v74, %v540
    %v635 = vadd.f32 %v75, %v545
    %v636 = vadd.f32 %v76, %v548
    %v637 = vadd.f32 %v77, %v553
    %v638 = vadd.f32 %v78, %v556
    %v639 = vadd.f32 %v79, %v561
    %v640 = vadd.f32 %v80, %v564
    %v641 = vadd.f32 %v81, %v569
    %v642 = vadd.f32 %v82, %v572
    %v643 = vadd.f32 %v83, %v577
    %v644 = vadd.f32 %v84, %v580
    %v645 = vadd.f32 %v85, %v585
    %v646 = vadd.f32 %v86, %v588
    %v647 = vadd.f32 %v87, %v593
    %v648 = vadd.f32 %v88, %v596
    %v649 = vadd.f32 %v89, %v601
    %v650 = vadd.f32 %v90, %v604
    %v651 = vadd.f32 %v91, %v609
    %v652 = vadd.f32 %v92, %v612
    %v653 = vadd.f32 %v93, %v617
    %v654 = vadd.f32 %v94, %v620
    %655 = vst [vmem:[#allocation8] sm:$0xff] %v623
    %656 = vst [vmem:[#allocation8 + $0x8] sm:$0xff] %v624
    %657 = vst [vmem:[#allocation8 + $0x10] sm:$0xff] %v625
    %658 = vst [vmem:[#allocation8 + $0x18] sm:$0xff] %v626
    %659 = vst [vmem:[#allocation8 + $0x20] sm:$0xff] %v627
    %660 = vst [vmem:[#allocation8 + $0x28] sm:$0xff] %v628
    %661 = vst [vmem:[#allocation8 + $0x30] sm:$0xff] %v629
    %662 = vst [vmem:[#allocation8 + $0x38] sm:$0xff] %v630
    %663 = vst [vmem:[#allocation8 + $0x40] sm:$0xff] %v631
    %664 = vst [vmem:[#allocation8 + $0x48] sm:$0xff] %v632
    %665 = vst [vmem:[#allocation8 + $0x50] sm:$0xff] %v633
    %666 = vst [vmem:[#allocation8 + $0x58] sm:$0xff] %v634
    %667 = vst [vmem:[#allocation8 + $0x60] sm:$0xff] %v635
    %668 = vst [vmem:[#allocation8 + $0x68] sm:$0xff] %v636
    %669 = vst [vmem:[#allocation8 + $0x70] sm:$0xff] %v637
    %670 = vst [vmem:[#allocation8 + $0x78] sm:$0xff] %v638
    %671 = vst [vmem:[#allocation8 + $0x80] sm:$0xff] %v639
    %672 = vst [vmem:[#allocation8 + $0x88] sm:$0xff] %v640
    %673 = vst [vmem:[#allocation8 + $0x90] sm:$0xff] %v641
    %674 = vst [vmem:[#allocation8 + $0x98] sm:$0xff] %v642
    %675 = vst [vmem:[#allocation8 + $0xa0] sm:$0xff] %v643
    %676 = vst [vmem:[#allocation8 + $0xa8] sm:$0xff] %v644
    %677 = vst [vmem:[#allocation8 + $0xb0] sm:$0xff] %v645
    %678 = vst [vmem:[#allocation8 + $0xb8] sm:$0xff] %v646
    %679 = vst [vmem:[#allocation8 + $0xc0] sm:$0xff] %v647
    %680 = vst [vmem:[#allocation8 + $0xc8] sm:$0xff] %v648
    %681 = vst [vmem:[#allocation8 + $0xd0] sm:$0xff] %v649
    %682 = vst [vmem:[#allocation8 + $0xd8] sm:$0xff] %v650
    %683 = vst [vmem:[#allocation8 + $0xe0] sm:$0xff] %v651
    %684 = vst [vmem:[#allocation8 + $0xe8] sm:$0xff] %v652
    %685 = vst [vmem:[#allocation8 + $0xf0] sm:$0xff] %v653
    %686 = vst [vmem:[#allocation8 + $0xf8] sm:$0xff] %v654
    // Predicated region
    $region34: #{tpu_custom_call.1} parent=1 // pred_check
      _
    $region35: #{tpu_custom_call.1} parent=1 // pred_check_branch
      %688 = sbr.rel (0) target = $region37
    $region36: #{tpu_custom_call.1} parent=1 // pred_region
      %s690 = ssub.s32 4096, 4096
      %691 = vsyncadd [#allocation4], %s690
      %s692 = sshll.u32 [#allocation8], 4
      %s693 = int_to_ptr.vmem [resolvable:$true] %s692
      %698 = dma.vmem_to_hbm [thread:$0]  %s693, 4096, %s5, [#allocation4], 128, 128, 8
    $region37: #{tpu_custom_call.1} parent=1 // pred_fallthru
      _
    // Predicated region
    $region38: #{tpu_custom_call.1} parent=1 // pred_check
      _
    $region39: #{tpu_custom_call.1} parent=1 // pred_check_branch
      %700 = sbr.rel (0) target = $region41
    $region40: #{tpu_custom_call.1} parent=1 // pred_region
      %701 = dma.done [#allocation4], 4096
    $region41: #{tpu_custom_call.1} parent=1 // pred_fallthru
      _
    %702 = vsyncpa [#allocation3], 1
    %703 = vsyncpa [#allocation6], 1
    %704 = vsyncpa [#allocation4], 1

</llo_original>
